<compile_context>
chip_gen: v7x
topology: tpu7x:2x2x1
jax: 0.10.0
libtpu: 0.0.40
codegen_flags: <defaults>
</compile_context>

<pallas_src>
import jax
import jax.numpy as jnp
from jax.experimental import pallas as pl
from jax.experimental.pallas import tpu as pltpu

IN_FEATURES = 4
HIDDEN = 16
OUT_FEATURES = 3
LANE = 128          # padded output width -> lane-dense stores


def irisnet_kernel(x_ref, w1_ref, w2_ref, b2_ref, o_ref):
    # x_ref: [TB, 5]   (input features + ones column for the folded fc1 bias)
    # w1_ref: [5, 16]  (fc1 weight with bias row appended)
    # w2_ref: [16, 128] (fc2 weight zero-padded on the output axis)
    # b2_ref: [1, 128]  (fc2 bias zero-padded)
    # o_ref : [TB, 128]
    x = x_ref[...]
    h = jnp.dot(x, w1_ref[...], preferred_element_type=jnp.float32)
    h = jnp.maximum(h, 0.0)                                   # ReLU
    # Tiny K=16 contraction; MXU is underutilized but the kernel is launch /
    # bandwidth bound, not MXU bound, so a padded dot is fine.
    o = jnp.dot(h, w2_ref[...], preferred_element_type=jnp.float32)
    o_ref[...] = (o + b2_ref[...]).astype(o_ref.dtype)


def irisnet_forward(x, w1, b1, w2, b2, *, batch_tile=256):
    """x: [B, 4] f32; w1: [4,16]; b1: [16]; w2: [16,3]; b2: [3]."""
    B = x.shape[0]
    # Fold the fc1 bias into the matmul: augment x with a ones column.
    x_aug = jnp.concatenate([x, jnp.ones((B, 1), x.dtype)], axis=1)       # [B, 5]
    w1_aug = jnp.concatenate([w1, b1.reshape(1, HIDDEN)], axis=0)         # [5, 16]
    f_in = x_aug.shape[1]
    # Lane-dense output: zero-pad fc2 to 128 output columns.
    w2_pad = jnp.zeros((HIDDEN, LANE), w2.dtype).at[:, :OUT_FEATURES].set(w2)
    b2_pad = jnp.zeros((1, LANE), b2.dtype).at[0, :OUT_FEATURES].set(b2.reshape(-1))

    if B <= batch_tile:
        # Tiny case: no grid, no pipelining — whole working set lives in VMEM.
        out = pl.pallas_call(
            irisnet_kernel,
            out_shape=jax.ShapeDtypeStruct((B, LANE), jnp.float32),
            in_specs=[pl.BlockSpec(memory_space=pltpu.MemorySpace.VMEM)] * 4,
            out_specs=pl.BlockSpec(memory_space=pltpu.MemorySpace.VMEM),
        )(x_aug, w1_aug, w2_pad, b2_pad)
        return out[:, :OUT_FEATURES]

    # Large batch: stream x / out in batch tiles, keep weights VMEM-resident.
    nb = pl.cdiv(B, batch_tile)
    b_pad = nb * batch_tile
    if b_pad != B:
        x_aug = jnp.pad(x_aug, ((0, b_pad - B), (0, 0)))
    out = pl.pallas_call(
        irisnet_kernel,
        out_shape=jax.ShapeDtypeStruct((b_pad, LANE), jnp.float32),
        grid=(nb,),
        in_specs=[
            pl.BlockSpec((batch_tile, f_in), lambda i: (i, 0)),
            pl.BlockSpec((f_in, HIDDEN), lambda i: (0, 0)),      # resident
            pl.BlockSpec((HIDDEN, LANE), lambda i: (0, 0)),      # resident
            pl.BlockSpec((1, LANE), lambda i: (0, 0)),           # resident
        ],
        out_specs=pl.BlockSpec((batch_tile, LANE), lambda i: (i, 0)),
        compiler_params=pltpu.CompilerParams(
            dimension_semantics=("parallel",)),
    )(x_aug, w1_aug, w2_pad, b2_pad)
    return out[:B, :OUT_FEATURES]


def init_params(key):
    """Deterministic init mimicking PyTorch nn.Linear default (uniform +-1/sqrt(fan_in))."""
    k1, k2, k3, k4 = jax.random.split(key, 4)
    bound1 = 1.0 / jnp.sqrt(float(IN_FEATURES))
    bound2 = 1.0 / jnp.sqrt(float(HIDDEN))
    w1 = jax.random.uniform(k1, (IN_FEATURES, HIDDEN), jnp.float32, -bound1, bound1)
    b1 = jax.random.uniform(k2, (HIDDEN,), jnp.float32, -bound1, bound1)
    w2 = jax.random.uniform(k3, (HIDDEN, OUT_FEATURES), jnp.float32, -bound2, bound2)
    b2 = jax.random.uniform(k4, (OUT_FEATURES,), jnp.float32, -bound2, bound2)
    return w1, b1, w2, b2


def reference_forward(x, w1, b1, w2, b2):
    h = jnp.maximum(x @ w1 + b1[None, :], 0.0)
    return h @ w2 + b2[None, :]


if __name__ == "__main__":
    key = jax.random.PRNGKey(0)
    kx, kp, kbig = jax.random.split(key, 3)
    w1, b1, w2, b2 = init_params(kp)

    # Small case (no-grid path): batch of 8 Iris-like samples, 4 features.
    x_small = jax.random.normal(kx, (8, IN_FEATURES), jnp.float32)
    out_small = jax.block_until_ready(irisnet_forward(x_small, w1, b1, w2, b2))
    ref_small = reference_forward(x_small, w1, b1, w2, b2)
    assert out_small.shape == (8, OUT_FEATURES), out_small.shape
    assert jnp.allclose(out_small, ref_small, atol=1e-5, rtol=1e-5), "small-batch mismatch"

    # Larger batch (tiled, weights-resident path; also exercises the pad/slice).
    x_big = jax.random.normal(kbig, (1000, IN_FEATURES), jnp.float32)
    out_big = jax.block_until_ready(irisnet_forward(x_big, w1, b1, w2, b2))
    ref_big = reference_forward(x_big, w1, b1, w2, b2)
    assert out_big.shape == (1000, OUT_FEATURES), out_big.shape
    assert jnp.allclose(out_big, ref_big, atol=1e-4, rtol=1e-5), "tiled-batch mismatch"

    print("KERNEL_OK")
</pallas_src>

<mosaic_0001>
module attributes {stable_mosaic.version = 11 : i64} {
  func.func @irisnet_kernel(%arg0: memref<8x5xf32, #tpu.memory_space<vmem>>, %arg1: memref<5x16xf32, #tpu.memory_space<vmem>>, %arg2: memref<16x128xf32, #tpu.memory_space<vmem>>, %arg3: memref<1x128xf32, #tpu.memory_space<vmem>>, %arg4: memref<8x128xf32, #tpu.memory_space<vmem>>) attributes {dimension_semantics = [], scalar_prefetch = 0 : i64, scratch_operands = 0 : i64, tpu.core_type = #tpu.core_type<tc>} {
    %c0 = arith.constant 0 : index
    %c0_0 = arith.constant 0 : index
    %0 = vector.load %arg0[%c0, %c0_0] : memref<8x5xf32, #tpu.memory_space<vmem>>, vector<8x5xf32>
    %c0_1 = arith.constant 0 : index
    %c0_2 = arith.constant 0 : index
    %1 = vector.load %arg1[%c0_1, %c0_2] : memref<5x16xf32, #tpu.memory_space<vmem>>, vector<5x16xf32>
    %cst = arith.constant dense<0.000000e+00> : vector<8x16xf32>
    %2 = tpu.matmul %0, %1, %cst {dimension_numbers = #tpu.dot_dimension_numbers<[1], [0], [0], [1], [0, 0, 1, 1], [], []>} : vector<8x5xf32>, vector<5x16xf32>, vector<8x16xf32> -> vector<8x16xf32>
    %cst_3 = arith.constant 0.000000e+00 : f32
    %3 = vector.broadcast %cst_3 : f32 to vector<8x16xf32>
    %4 = arith.maximumf %2, %3 : vector<8x16xf32>
    %c0_4 = arith.constant 0 : index
    %c0_5 = arith.constant 0 : index
    %5 = vector.load %arg2[%c0_4, %c0_5] : memref<16x128xf32, #tpu.memory_space<vmem>>, vector<16x128xf32>
    %cst_6 = arith.constant dense<0.000000e+00> : vector<8x128xf32>
    %6 = tpu.matmul %4, %5, %cst_6 {dimension_numbers = #tpu.dot_dimension_numbers<[1], [0], [0], [1], [0, 0, 1, 1], [], []>} : vector<8x16xf32>, vector<16x128xf32>, vector<8x128xf32> -> vector<8x128xf32>
    %c0_7 = arith.constant 0 : index
    %c0_8 = arith.constant 0 : index
    %7 = vector.load %arg3[%c0_7, %c0_8] : memref<1x128xf32, #tpu.memory_space<vmem>>, vector<1x128xf32>
    %8 = vector.broadcast %7 : vector<1x128xf32> to vector<8x128xf32>
    %9 = arith.addf %6, %8 : vector<8x128xf32>
    %c0_9 = arith.constant 0 : index
    %c0_10 = arith.constant 0 : index
    %10 = vector.load %arg4[%c0_9, %c0_10] : memref<8x128xf32, #tpu.memory_space<vmem>>, vector<8x128xf32>
    tpu.vector_store %arg4[%c0_9, %c0_10], %9 {strides = array<i32>} : memref<8x128xf32, #tpu.memory_space<vmem>>, vector<8x128xf32>,
    return
  }
}

</mosaic_0001>

<llo_original>
// kernel: tpu_custom_call.1
$region0: #{tpu_custom_call.1}
  #allocation0 [shape = 'u32[]', space=smem, size = 0x4, offset = 0x4, fixed_abs, tag = 'smem constant byte address 0x4 - core index']
  #allocation1 [shape = 'u32[144,128]{1,0:T(1,128)}', space=vmem, size = 0x12000, scoped, tag = 'internal scratch']
  %s0 = inlined_call_operand.hbm [shape: f32[8,5], index: 0, kind: input, shape index: {}]
  %s1 = inlined_call_operand.hbm [shape: f32[5,16], index: 1, kind: input, shape index: {}]
  %s2 = inlined_call_operand.hbm [shape: f32[16,128], index: 2, kind: input, shape index: {}]
  %s3 = inlined_call_operand.vmem [shape: f32[1,128], index: 3, kind: input, shape index: {}]
  %s4 = inlined_call_operand.hbm [shape: f32[8,128], index: 4, kind: output, shape index: {}]
  %s5 = sld [smem:[#allocation0]]
  $region38: #{tpu_custom_call.1} parent=0
    _
  %s7 = ssub.s32 1, %s5
  %s8 = scalar_select 0, %s7, %s5
  $region1: #{tpu_custom_call.1} parent=0
    #allocation2 [shape = 'u8[4096]{0}', space=vmem, size = 0x1000, scoped, tag = 'input window, operand 0, single buffered']
    #allocation3 [shape = 's32[1]{0}', space=sflag, size = 0x4, scoped, tag = 'scoped memory for tpu_custom_call.1']
    #allocation4 [shape = 's32[1]{0}', space=sflag, size = 0x4, scoped, tag = 'scoped memory for tpu_custom_call.1']
    #allocation5 [shape = 'u8[4096]{0}', space=vmem, size = 0x1000, scoped, tag = 'input window, operand 1, single buffered']
    #allocation6 [shape = 's32[1]{0}', space=sflag, size = 0x4, scoped, tag = 'scoped memory for tpu_custom_call.1']
    #allocation7 [shape = 'u8[8192]{0}', space=vmem, size = 0x2000, scoped, tag = 'input window, operand 2, single buffered']
    #allocation8 [shape = 'u8[4096]{0}', space=vmem, size = 0x1000, scoped, tag = 'output window, operand 0, single buffered']
    %9 = vsyncpa [#allocation3], 0
    %10 = vsyncpa [#allocation6], 0
    %11 = vsyncpa [#allocation4], 0
    // Predicated region
    $region2: #{tpu_custom_call.1} parent=1 // pred_check
      _
    $region3: #{tpu_custom_call.1} parent=1 // pred_check_branch
      %13 = sbr.rel (0) target = $region5
    $region4: #{tpu_custom_call.1} parent=1 // pred_region
      %s15 = ssub.s32 128, 128
      %16 = vsyncadd [#allocation3], %s15
      %s18 = sshll.u32 [#allocation2], 4
      %s19 = int_to_ptr.vmem [resolvable:$true] %s18
      %21 = dma.hbm_to_vmem [thread:$0]  %s0, 128, %s19, [#allocation3]
    $region5: #{tpu_custom_call.1} parent=1 // pred_fallthru
      _
    // Predicated region
    $region6: #{tpu_custom_call.1} parent=1 // pred_check
      _
    $region7: #{tpu_custom_call.1} parent=1 // pred_check_branch
      %23 = sbr.rel (0) target = $region9
    $region8: #{tpu_custom_call.1} parent=1 // pred_region
      %s25 = ssub.s32 128, 128
      %26 = vsyncadd [#allocation6], %s25
      %s28 = sshll.u32 [#allocation5], 4
      %s29 = int_to_ptr.vmem [resolvable:$true] %s28
      %31 = dma.hbm_to_vmem [thread:$0]  %s1, 128, %s29, [#allocation6]
    $region9: #{tpu_custom_call.1} parent=1 // pred_fallthru
      _
    // Predicated region
    $region10: #{tpu_custom_call.1} parent=1 // pred_check
      _
    $region11: #{tpu_custom_call.1} parent=1 // pred_check_branch
      %33 = sbr.rel (0) target = $region13
    $region12: #{tpu_custom_call.1} parent=1 // pred_region
      %s35 = ssub.s32 256, 256
      %36 = vsyncadd [#allocation6], %s35
      %s37 = sshll.u32 [#allocation7], 4
      %s38 = int_to_ptr.vmem [resolvable:$true] %s37
      %43 = dma.hbm_to_vmem [thread:$0]  %s2, 256, %s38, [#allocation6], 128, 128, 8
    $region13: #{tpu_custom_call.1} parent=1 // pred_fallthru
      _
    // Predicated region
    $region14: #{tpu_custom_call.1} parent=1 // pred_check
      _
    $region15: #{tpu_custom_call.1} parent=1 // pred_check_branch
      %45 = sbr.rel (0) target = $region17
    $region16: #{tpu_custom_call.1} parent=1 // pred_region
      _
    $region17: #{tpu_custom_call.1} parent=1 // pred_fallthru
      _
    // Predicated region
    $region18: #{tpu_custom_call.1} parent=1 // pred_check
      _
    $region19: #{tpu_custom_call.1} parent=1 // pred_check_branch
      %47 = sbr.rel (0) target = $region21
    $region20: #{tpu_custom_call.1} parent=1 // pred_region
      %48 = dma.done [#allocation3], 128
    $region21: #{tpu_custom_call.1} parent=1 // pred_fallthru
      _
    // Predicated region
    $region22: #{tpu_custom_call.1} parent=1 // pred_check
      _
    $region23: #{tpu_custom_call.1} parent=1 // pred_check_branch
      %50 = sbr.rel (0) target = $region25
    $region24: #{tpu_custom_call.1} parent=1 // pred_region
      %51 = dma.done [#allocation6], 128
    $region25: #{tpu_custom_call.1} parent=1 // pred_fallthru
      _
    // Predicated region
    $region26: #{tpu_custom_call.1} parent=1 // pred_check
      _
    $region27: #{tpu_custom_call.1} parent=1 // pred_check_branch
      %53 = sbr.rel (0) target = $region29
    $region28: #{tpu_custom_call.1} parent=1 // pred_region
      %54 = dma.done [#allocation6], 256
    $region29: #{tpu_custom_call.1} parent=1 // pred_fallthru
      _
    %v55 = vld [vmem:[#allocation2] sm:$0xff]
    %v56 = vld [vmem:[#allocation5] sm:$0x1f]
    %vm57 = vcmask 39936
    %v59 = vsel %vm57, %v55, 0
    %vm61 = vcmask 1044480
    %v63 = vsel %vm61, %v56, 0
    %65 = vmatprep.subr.mxu0 0.0
    %66 = vmatpush1.msra.mxu0 %v63
    %67 = vmatprep.subr.mxu0 0.0
    %68 = vmatpush1.msra.mxu0 0.0
    %69 = vmatprep.subr.mxu0 0.0
    %70 = vmatpush1.msra.mxu0 0.0
    %71 = vmatprep.subr.mxu0 0.0
    %72 = vmatpush1.msra.mxu0 0.0
    %73 = vmatprep.subr.mxu0 0.0
    %74 = vmatpush1.msra.mxu0 0.0
    %75 = vmatprep.subr.mxu0 0.0
    %76 = vmatpush1.msra.mxu0 0.0
    %77 = vmatprep.subr.mxu0 0.0
    %78 = vmatpush1.msra.mxu0 0.0
    %79 = vmatprep.subr.mxu0 0.0
    %80 = vmatpush1.msra.mxu0 0.0
    %81 = vmatprep.subr.mxu0 0.0
    %82 = vmatpush1.msra.mxu0 0.0
    %83 = vmatprep.subr.mxu0 0.0
    %84 = vmatpush1.msra.mxu0 0.0
    %85 = vmatprep.subr.mxu0 0.0
    %86 = vmatpush1.msra.mxu0 0.0
    %87 = vmatprep.subr.mxu0 0.0
    %88 = vmatpush1.msra.mxu0 0.0
    %89 = vmatprep.subr.mxu0 0.0
    %90 = vmatpush1.msra.mxu0 0.0
    %91 = vmatprep.subr.mxu0 0.0
    %92 = vmatpush1.msra.mxu0 0.0
    %93 = vmatprep.subr.mxu0 0.0
    %94 = vmatpush1.msra.mxu0 0.0
    %95 = vmatprep.subr.mxu0 0.0
    %96 = vmatpush1.msra.mxu0 0.0
    %97 = vmatprep.subr.mxu0 0.0
    %98 = vmatpush1.msra.mxu0 0.0
    %99 = vmatprep.subr.mxu0 0.0
    %100 = vmatpush1.msra.mxu0 0.0
    %101 = vmatprep.subr.mxu0 0.0
    %102 = vmatpush1.msra.mxu0 0.0
    %103 = vmatprep.subr.mxu0 0.0
    %104 = vmatpush1.msra.mxu0 0.0
    %105 = vmatprep.subr.mxu0 0.0
    %106 = vmatpush1.msra.mxu0 0.0
    %107 = vmatprep.subr.mxu0 0.0
    %108 = vmatpush1.msra.mxu0 0.0
    %109 = vmatprep.subr.mxu0 0.0
    %110 = vmatpush1.msra.mxu0 0.0
    %111 = vmatprep.subr.mxu0 0.0
    %112 = vmatpush1.msra.mxu0 0.0
    %113 = vmatprep.subr.mxu0 0.0
    %114 = vmatpush1.msra.mxu0 0.0
    %115 = vmatprep.subr.mxu0 0.0
    %116 = vmatpush1.msra.mxu0 0.0
    %117 = vmatprep.subr.mxu0 0.0
    %118 = vmatpush1.msra.mxu0 0.0
    %119 = vmatprep.subr.mxu0 0.0
    %120 = vmatpush1.msra.mxu0 0.0
    %121 = vmatprep.subr.mxu0 0.0
    %122 = vmatpush1.msra.mxu0 0.0
    %123 = vmatprep.subr.mxu0 0.0
    %124 = vmatpush1.msra.mxu0 0.0
    %125 = vmatprep.subr.mxu0 0.0
    %126 = vmatpush1.msra.mxu0 0.0
    %127 = vmatprep.subr.mxu0 0.0
    %128 = vmatpush1.msra.mxu0 0.0
    %129 = vmatprep.mubr.f32.mxu0 0.0
    %130 = vmatmul.mubr.f32.gmra.mrb[0].mxu0 %v59
    %v131 = vpop.f32.mrb[0].mxu0
    %v132 = vadd.f32 0.0, %v131
    %v133 = vpop.f32.mrb[0].mxu0
    %134 = vdwg.mxu0
    %v135 = vmax.f32 %v132, 0.0
    %v136 = vld [vmem:[#allocation7] sm:$0xff]
    %v137 = vld [vmem:[#allocation7 + $0x8] sm:$0xff]
    %v138 = vld [vmem:[%s3] sm:$0x1]
    %v140 = vlaneseq
    %v141 = vshrl.u32 %v140, 7
    %v142 = vsub.s32 0, %v141
    %v143 = vrot.slane %v138, %v142
    %vm145 = vcmask 130048
    %v147 = vsel %vm145, %v135, 0
    %149 = vmatprep.subr.mxu0 0.0
    %150 = vmatpush1.msra.mxu0 %v136
    %151 = vmatprep.subr.mxu0 0.0
    %152 = vmatpush1.msra.mxu0 %v137
    %153 = vmatprep.subr.mxu0 0.0
    %154 = vmatpush1.msra.mxu0 0.0
    %155 = vmatprep.subr.mxu0 0.0
    %156 = vmatpush1.msra.mxu0 0.0
    %157 = vmatprep.subr.mxu0 0.0
    %158 = vmatpush1.msra.mxu0 0.0
    %159 = vmatprep.subr.mxu0 0.0
    %160 = vmatpush1.msra.mxu0 0.0
    %161 = vmatprep.subr.mxu0 0.0
    %162 = vmatpush1.msra.mxu0 0.0
    %163 = vmatprep.subr.mxu0 0.0
    %164 = vmatpush1.msra.mxu0 0.0
    %165 = vmatprep.subr.mxu0 0.0
    %166 = vmatpush1.msra.mxu0 0.0
    %167 = vmatprep.subr.mxu0 0.0
    %168 = vmatpush1.msra.mxu0 0.0
    %169 = vmatprep.subr.mxu0 0.0
    %170 = vmatpush1.msra.mxu0 0.0
    %171 = vmatprep.subr.mxu0 0.0
    %172 = vmatpush1.msra.mxu0 0.0
    %173 = vmatprep.subr.mxu0 0.0
    %174 = vmatpush1.msra.mxu0 0.0
    %175 = vmatprep.subr.mxu0 0.0
    %176 = vmatpush1.msra.mxu0 0.0
    %177 = vmatprep.subr.mxu0 0.0
    %178 = vmatpush1.msra.mxu0 0.0
    %179 = vmatprep.subr.mxu0 0.0
    %180 = vmatpush1.msra.mxu0 0.0
    %181 = vmatprep.subr.mxu0 0.0
    %182 = vmatpush1.msra.mxu0 0.0
    %183 = vmatprep.subr.mxu0 0.0
    %184 = vmatpush1.msra.mxu0 0.0
    %185 = vmatprep.subr.mxu0 0.0
    %186 = vmatpush1.msra.mxu0 0.0
    %187 = vmatprep.subr.mxu0 0.0
    %188 = vmatpush1.msra.mxu0 0.0
    %189 = vmatprep.subr.mxu0 0.0
    %190 = vmatpush1.msra.mxu0 0.0
    %191 = vmatprep.subr.mxu0 0.0
    %192 = vmatpush1.msra.mxu0 0.0
    %193 = vmatprep.subr.mxu0 0.0
    %194 = vmatpush1.msra.mxu0 0.0
    %195 = vmatprep.subr.mxu0 0.0
    %196 = vmatpush1.msra.mxu0 0.0
    %197 = vmatprep.subr.mxu0 0.0
    %198 = vmatpush1.msra.mxu0 0.0
    %199 = vmatprep.subr.mxu0 0.0
    %200 = vmatpush1.msra.mxu0 0.0
    %201 = vmatprep.subr.mxu0 0.0
    %202 = vmatpush1.msra.mxu0 0.0
    %203 = vmatprep.subr.mxu0 0.0
    %204 = vmatpush1.msra.mxu0 0.0
    %205 = vmatprep.subr.mxu0 0.0
    %206 = vmatpush1.msra.mxu0 0.0
    %207 = vmatprep.subr.mxu0 0.0
    %208 = vmatpush1.msra.mxu0 0.0
    %209 = vmatprep.subr.mxu0 0.0
    %210 = vmatpush1.msra.mxu0 0.0
    %211 = vmatprep.subr.mxu0 0.0
    %212 = vmatpush1.msra.mxu0 0.0
    %213 = vmatprep.mubr.f32.mxu0 0.0
    %214 = vmatmul.mubr.f32.gmra.mrb[0].mxu0 %v147
    %v215 = vpop.f32.mrb[0].mxu0
    %v216 = vadd.f32 %v143, %v215
    %v217 = vpop.f32.mrb[0].mxu0
    %218 = vdwg.mxu0
    %219 = vst [vmem:[#allocation8] sm:$0xff] %v216
    // Predicated region
    $region30: #{tpu_custom_call.1} parent=1 // pred_check
      _
    $region31: #{tpu_custom_call.1} parent=1 // pred_check_branch
      %221 = sbr.rel (0) target = $region33
    $region32: #{tpu_custom_call.1} parent=1 // pred_region
      %s223 = ssub.s32 128, 128
      %224 = vsyncadd [#allocation4], %s223
      %s226 = sshll.u32 [#allocation8], 4
      %s227 = int_to_ptr.vmem [resolvable:$true] %s226
      %229 = dma.vmem_to_hbm [thread:$0]  %s227, 128, %s4, [#allocation4]
    $region33: #{tpu_custom_call.1} parent=1 // pred_fallthru
      _
    // Predicated region
    $region34: #{tpu_custom_call.1} parent=1 // pred_check
      _
    $region35: #{tpu_custom_call.1} parent=1 // pred_check_branch
      %231 = sbr.rel (0) target = $region37
    $region36: #{tpu_custom_call.1} parent=1 // pred_region
      %232 = dma.done [#allocation4], 128
    $region37: #{tpu_custom_call.1} parent=1 // pred_fallthru
      _
    %233 = vsyncpa [#allocation3], 1
    %234 = vsyncpa [#allocation6], 1
    %235 = vsyncpa [#allocation4], 1

</llo_original>
